<compile_context>
chip_gen: v6e
topology: v6e:2x2x1
jax: 0.10.0
libtpu: 0.0.40
codegen_flags: <defaults>
</compile_context>

<pallas_src>
import functools

import jax
import jax.numpy as jnp
from jax import lax
from jax.experimental import pallas as pl
from jax.experimental.pallas import tpu as pltpu


_LANE = 128      # TPU vreg lane width
_UNROLL = 8      # PGD steps per unrolled block (= convergence-check interval)
_RTOL = 1e-4     # relative early-exit tolerance on max|S_new - S_old|
_ATOL = 1e-9


def _num_tensorcores():
    """Best-effort TensorCore count of device 0 (v7x megacore -> 2)."""
    try:
        dev = jax.devices()[0]
        for attr in ("num_cores", "core_count"):
            v = getattr(dev, attr, None)
            if isinstance(v, int) and v > 0:
                return v
    except Exception:
        pass
    return 1


def _choose_tiling(k, n):
    """Pick (tn, n_pad, num_chains) for the column (sample) axis."""
    n128 = ((max(n, 1) + _LANE - 1) // _LANE) * _LANE
    # vreg budget: keep the f32 loop-carried S (k x tn) around <= 64 KiB
    # (B is re-read from VMEM, so it does not count against vregs).
    cap = (16384 // max(k, 1)) // _LANE * _LANE
    cap = max(_LANE, min(cap, 2048))
    tiles = -(-n128 // cap)
    ntc = _num_tensorcores()
    if ntc >= 2 and n128 >= ntc * _LANE:
        # Keep the grid at >= ntc even steps so both TensorCores get work.
        tiles = max(tiles, ntc)
        tiles = ((tiles + ntc - 1) // ntc) * ntc
    tn = -(-n128 // tiles)
    tn = ((tn + _LANE - 1) // _LANE) * _LANE
    tn = min(tn, cap)
    n_pad = tiles * tn
    # Two independent chains only when each half stays lane-aligned (mult of 128).
    num_chains = 2 if (tn >= 256 and tn % 256 == 0) else 1
    return tn, n_pad, num_chains


# --------------------------------------------------------------------------- #
# Pallas kernel: projected gradient descent on one lane-dense tile of columns.
# --------------------------------------------------------------------------- #
def _pgd_nnls_kernel(m_ref, b_ref, s_ref, *, max_blocks, unroll, rtol, atol,
                     num_chains, early_exit):
    """Iterate S <- max(M @ S + B, 0) with an early convergence exit.

    m_ref: (k, k)  VMEM, M = I - eta * AtA (same block for every grid step)
    b_ref: (k, TN) VMEM, B = eta * AtX tile (re-read from VMEM each step)
    s_ref: (k, TN) VMEM output tile
    """
    k, tn = b_ref.shape
    cw = tn // num_chains

    # Loop-invariant bf16 copy of M (cast once; MXU is bf16-native).
    Mb = m_ref[...].astype(jnp.bfloat16)

    def bslice(c):
        # Re-load from VMEM inside the loop (idle vld slots, frees vregs for S).
        return b_ref[:, c * cw:(c + 1) * cw]

    def step(S, c):
        # bf16 operands on the MXU, f32 accumulate, f32 epilogue on the VPU.
        P = jnp.dot(Mb, S.astype(jnp.bfloat16),
                    preferred_element_type=jnp.float32)
        return jnp.maximum(P + bslice(c), 0.0)

    # Nonnegative init (matches max(eta*AtX, 0) of the reference).
    S = tuple(jnp.maximum(bslice(c), 0.0) for c in range(num_chains))

    def run_block(S):
        for _ in range(unroll):
            # num_chains independent dependency chains, interleaved so the MXU
            # drain / VPU epilogue of one overlaps the pushes of the other.
            S = tuple(step(S[c], c) for c in range(num_chains))
        return S

    # TODO(synk): if a bundle dump shows a per-iteration weight push of M, hold
    # it in MXU staging registers via pltpu.matmul_push_rhs/acc_lhs/pop.
    if early_exit:
        def cond_fn(carry):
            i, _, delta, snorm = carry
            return jnp.logical_and(i < max_blocks,
                                   delta[0, 0] > rtol * snorm[0, 0] + atol)

        def body_fn(carry):
            i, S, _, _ = carry
            S_prev = S
            S = run_block(S)
            # Convergence metrics: lane reduce then sublane reduce (XLU/VPU,
            # off the MXU-bound critical path).
            delta = jnp.zeros((1, 1), jnp.float32)
            snorm = jnp.zeros((1, 1), jnp.float32)
            for c in range(num_chains):
                d = jnp.max(jnp.abs(S[c] - S_prev[c]), axis=1, keepdims=True)
                m = jnp.max(jnp.abs(S[c]), axis=1, keepdims=True)
                delta = jnp.maximum(delta, jnp.max(d, axis=0, keepdims=True))
                snorm = jnp.maximum(snorm, jnp.max(m, axis=0, keepdims=True))
            return (i + 1, S, delta, snorm)

        init = (jnp.int32(0), S,
                jnp.full((1, 1), jnp.inf, dtype=jnp.float32),
                jnp.zeros((1, 1), jnp.float32))
        _, S, _, _ = lax.while_loop(cond_fn, body_fn, init)
    else:
        S = lax.fori_loop(0, max_blocks, lambda _, s: run_block(s), S)

    for c in range(num_chains):
        s_ref[:, c * cw:(c + 1) * cw] = S[c]


# --------------------------------------------------------------------------- #
# Shared XLA prep: step size folded into the PGD constants M and B.
# --------------------------------------------------------------------------- #
def _pgd_constants(A, X, power_iters=50, margin=1.1):
    A = A.astype(jnp.float32)
    X = X.astype(jnp.float32)
    k = A.shape[1]
    AtA = lax.dot_general(A, A, (((0,), (0,)), ((), ())),
                          preferred_element_type=jnp.float32)        # (k, k)
    AtX = lax.dot_general(A, X, (((0,), (0,)), ((), ())),
                          preferred_element_type=jnp.float32)        # (k, n)

    # Spectral-norm estimate of AtA: 50 power iterations + 1.1 margin, capped
    # by the trace (a valid upper bound for PSD matrices) when nearly rank-1.
    v0 = jnp.full((k,), 1.0 / jnp.sqrt(jnp.float32(k)), dtype=jnp.float32)

    def power_body(_, v):
        w = AtA @ v
        return w / (jnp.linalg.norm(w) + 1e-30)

    v = lax.fori_loop(0, power_iters, power_body, v0)
    sigma = v @ (AtA @ v)
    trace = jnp.trace(AtA)
    lip = jnp.clip(margin * sigma, 1e-8, jnp.maximum(trace, 1e-8))
    eta = 1.0 / lip

    M = jnp.eye(k, dtype=jnp.float32) - eta * AtA   # (k, k)
    B = eta * AtX                                   # (k, n)
    return M, B


# --------------------------------------------------------------------------- #
# One LsqNonneg layer: S = argmin_{S>=0} ||A S - X||_F^2  (approximate, PGD).
# --------------------------------------------------------------------------- #
def lsqnonneg_pallas(A, X, num_iters=1000, early_exit=True):
    m, k = A.shape
    m2, n = X.shape
    assert m == m2, "A and X row dimensions must match"

    M, B = _pgd_constants(A, X)

    tn, n_pad, num_chains = _choose_tiling(k, n)
    if n_pad != n:
        # Zero columns of X give zero columns of AtX and therefore zero S.
        B = jnp.pad(B, ((0, 0), (0, n_pad - n)))

    max_blocks = -(-num_iters // _UNROLL)
    kernel = functools.partial(
        _pgd_nnls_kernel, max_blocks=max_blocks, unroll=_UNROLL,
        rtol=_RTOL, atol=_ATOL, num_chains=num_chains, early_exit=early_exit)

    grid = (n_pad // tn,)
    S = pl.pallas_call(
        kernel,
        out_shape=jax.ShapeDtypeStruct((k, n_pad), jnp.float32),
        grid=grid,
        in_specs=[
            pl.BlockSpec((k, k), lambda j: (0, 0)),    # M: resident across grid
            pl.BlockSpec((k, tn), lambda j: (0, j)),   # B tile over samples
        ],
        out_specs=pl.BlockSpec((k, tn), lambda j: (0, j)),
        compiler_params=pltpu.CompilerParams(
            dimension_semantics=("parallel",)),        # megacore on v7x
    )(M, B)

    return S[:, :n]


# --------------------------------------------------------------------------- #
# Neural_NMF forward pass (whole chain under one jit).
# --------------------------------------------------------------------------- #
def init_neural_nmf_params(depth_info, key):
    """Deterministic nonnegative init of the factor matrices A_i."""
    A_lst = []
    for i in range(len(depth_info) - 1):
        key, sub = jax.random.split(key)
        A = jnp.abs(
            jax.random.normal(
                sub, (depth_info[i], depth_info[i + 1]), dtype=jnp.float32))
        A_lst.append(A)
    return A_lst


@functools.partial(jax.jit, static_argnums=(2,))
def _forward_jit(A_tup, X, num_iters):
    S_lst = []
    cur = X
    for A in A_tup:
        cur = lsqnonneg_pallas(A, cur, num_iters=num_iters)
        S_lst.append(cur)
    return tuple(S_lst)


def neural_nmf_forward(A_lst, depth_info, X, c=None, num_iters=1000):
    """Forward pass of Neural_NMF (c=None path: returns S_lst)."""
    if X.ndim != 2:
        raise ValueError(
            "Expected a two-dimensional Tensor, but X is of shape {}".format(X.shape))
    if X.shape[0] != depth_info[0]:
        raise ValueError(
            "Dimension 0 of X should match entry 0 of depth_info, "
            "but values were {} and {}".format(X.shape[0], depth_info[0]))
    S_lst = list(_forward_jit(tuple(A_lst), X, int(num_iters)))
    if c is None:
        return S_lst
    # TODO(synk): c != None classification branch needs torch.pinverse (SVD
    # pseudo-inverse) of S_L, which has no clean Pallas equivalent.
    return S_lst


# --------------------------------------------------------------------------- #
# Pure-JAX reference (same PGD algorithm, same bf16 matmul + early exit).
# --------------------------------------------------------------------------- #
@functools.partial(jax.jit, static_argnums=(2,))
def _lsqnonneg_ref(A, X, num_iters=1000):
    M, B = _pgd_constants(A, X)
    Mb = M.astype(jnp.bfloat16)
    S0 = jnp.maximum(B, 0.0)
    max_blocks = -(-num_iters // _UNROLL)

    def step(S):
        return jnp.maximum(
            jnp.dot(Mb, S.astype(jnp.bfloat16),
                    preferred_element_type=jnp.float32) + B, 0.0)

    def cond_fn(carry):
        i, _, delta, snorm = carry
        return jnp.logical_and(i < max_blocks, delta > _RTOL * snorm + _ATOL)

    def body_fn(carry):
        i, S, _, _ = carry
        S_prev = S
        for _ in range(_UNROLL):
            S = step(S)
        return (i + 1, S, jnp.max(jnp.abs(S - S_prev)), jnp.max(jnp.abs(S)))

    init = (jnp.int32(0), S0, jnp.float32(jnp.inf), jnp.float32(0.0))
    return lax.while_loop(cond_fn, body_fn, init)[1]


if __name__ == "__main__":
    # Small, deterministic example consistent with the module's forward:
    # depth_info = [m, k1, k2], input X is (m, n).
    depth_info = [32, 16, 8]
    n = 16
    num_iters = 1000

    key = jax.random.PRNGKey(0)
    key, kx = jax.random.split(key)
    X = jnp.abs(jax.random.normal(kx, (depth_info[0], n), dtype=jnp.float32))
    A_lst = init_neural_nmf_params(depth_info, key)

    # Pallas forward pass (whole chain under one jit).
    S_lst = neural_nmf_forward(A_lst, depth_info, X, num_iters=num_iters)
    S_lst = [jax.block_until_ready(s) for s in S_lst]

    # Sanity checks: shapes, finiteness, nonnegativity of every S_i.
    assert len(S_lst) == len(depth_info) - 1
    for i, S in enumerate(S_lst):
        expect_shape = (depth_info[i + 1], n)
        assert S.shape == expect_shape, (S.shape, expect_shape)
        assert bool(jnp.all(jnp.isfinite(S)))
        assert bool(jnp.all(S >= 0.0))

    # Cross-check against the pure-JAX reference chain (loose tolerance: bf16
    # MXU operands and hundreds of chained iterations accumulate tiny drift).
    cur_ref = X
    for i, A in enumerate(A_lst):
        cur_ref = jax.block_until_ready(_lsqnonneg_ref(A, cur_ref, num_iters))
        scale = float(jnp.max(jnp.abs(cur_ref))) + 1.0
        max_diff = float(jnp.max(jnp.abs(S_lst[i] - cur_ref)))
        assert max_diff < 2e-2 * scale, (i, max_diff, scale)

    print("KERNEL_OK")
</pallas_src>

<mosaic_0001>
module attributes {stable_mosaic.version = 11 : i64} {
  func.func @_pgd_nnls_kernel(%arg0: i32, %arg1: memref<16x16xf32, #tpu.memory_space<vmem>>, %arg2: memref<16x128xf32, #tpu.memory_space<vmem>>, %arg3: memref<16x128xf32, #tpu.memory_space<vmem>>) attributes {dimension_semantics = [#tpu.dimension_semantics<parallel>], iteration_bounds = array<i64: 1>, scalar_prefetch = 0 : i64, scratch_operands = 0 : i64, tpu.core_type = #tpu.core_type<tc>, window_params = [{pipeline_mode = #tpu.pipeline_mode<synchronous>, transform_indices = @transform_0, window_bounds = array<i64: 16, 16>}, {transform_indices = @transform_1, window_bounds = array<i64: 16, 128>}, {transform_indices = @transform_2, window_bounds = array<i64: 16, 128>}]} {
    %c0 = arith.constant 0 : index
    %c0_0 = arith.constant 0 : index
    %0 = vector.load %arg1[%c0, %c0_0] : memref<16x16xf32, #tpu.memory_space<vmem>>, vector<16x16xf32>
    %1 = arith.truncf %0 : vector<16x16xf32> to vector<16x16xbf16>
    %c0_1 = arith.constant 0 : index
    %c0_2 = arith.constant 0 : index
    %2 = vector.load %arg2[%c0_1, %c0_2] : memref<16x128xf32, #tpu.memory_space<vmem>>, vector<16x128xf32>
    %cst = arith.constant 0.000000e+00 : f32
    %3 = vector.broadcast %cst : f32 to vector<16x128xf32>
    %4 = arith.maximumf %2, %3 : vector<16x128xf32>
    %cst_3 = arith.constant 0x7F800000 : f32
    %5 = vector.broadcast %cst_3 : f32 to vector<1x1xf32>
    %cst_4 = arith.constant 0.000000e+00 : f32
    %6 = vector.broadcast %cst_4 : f32 to vector<1x1xf32>
    %c0_i32 = arith.constant 0 : i32
    %7:4 = scf.while (%arg4 = %c0_i32, %arg5 = %4, %arg6 = %5, %arg7 = %6) : (i32, vector<16x128xf32>, vector<1x1xf32>, vector<1x1xf32>) -> (i32, vector<16x128xf32>, vector<1x1xf32>, vector<1x1xf32>) {
      %c125_i32 = arith.constant 125 : i32
      %9 = arith.cmpi slt, %arg4, %c125_i32 : i32
      %10 = vector.extract %arg6[0, 0] : f32 from vector<1x1xf32>
      %11 = vector.extract %arg7[0, 0] : f32 from vector<1x1xf32>
      %cst_7 = arith.constant 9.99999974E-5 : f32
      %12 = arith.mulf %cst_7, %11 : f32
      %cst_8 = arith.constant 9.99999971E-10 : f32
      %13 = arith.addf %12, %cst_8 : f32
      %14 = arith.cmpf ogt, %10, %13 : f32
      %15 = arith.andi %9, %14 : i1
      scf.condition(%15) %arg4, %arg5, %arg6, %arg7 : i32, vector<16x128xf32>, vector<1x1xf32>, vector<1x1xf32>
    } do {
    ^bb0(%arg4: i32, %arg5: vector<16x128xf32>, %arg6: vector<1x1xf32>, %arg7: vector<1x1xf32>):
      %9 = arith.truncf %arg5 : vector<16x128xf32> to vector<16x128xbf16>
      %cst_7 = arith.constant dense<0.000000e+00> : vector<16x128xf32>
      %10 = tpu.matmul %1, %9, %cst_7 {dimension_numbers = #tpu.dot_dimension_numbers<[1], [0], [0], [1], [0, 0, 1, 1], [], []>} : vector<16x16xbf16>, vector<16x128xbf16>, vector<16x128xf32> -> vector<16x128xf32>
      %c0_8 = arith.constant 0 : index
      %c0_9 = arith.constant 0 : index
      %11 = vector.load %arg2[%c0_8, %c0_9] : memref<16x128xf32, #tpu.memory_space<vmem>>, vector<16x128xf32>
      %12 = arith.addf %10, %11 : vector<16x128xf32>
      %cst_10 = arith.constant 0.000000e+00 : f32
      %13 = vector.broadcast %cst_10 : f32 to vector<16x128xf32>
      %14 = arith.maximumf %12, %13 : vector<16x128xf32>
      %15 = arith.truncf %14 : vector<16x128xf32> to vector<16x128xbf16>
      %cst_11 = arith.constant dense<0.000000e+00> : vector<16x128xf32>
      %16 = tpu.matmul %1, %15, %cst_11 {dimension_numbers = #tpu.dot_dimension_numbers<[1], [0], [0], [1], [0, 0, 1, 1], [], []>} : vector<16x16xbf16>, vector<16x128xbf16>, vector<16x128xf32> -> vector<16x128xf32>
      %c0_12 = arith.constant 0 : index
      %c0_13 = arith.constant 0 : index
      %17 = vector.load %arg2[%c0_12, %c0_13] : memref<16x128xf32, #tpu.memory_space<vmem>>, vector<16x128xf32>
      %18 = arith.addf %16, %17 : vector<16x128xf32>
      %cst_14 = arith.constant 0.000000e+00 : f32
      %19 = vector.broadcast %cst_14 : f32 to vector<16x128xf32>
      %20 = arith.maximumf %18, %19 : vector<16x128xf32>
      %21 = arith.truncf %20 : vector<16x128xf32> to vector<16x128xbf16>
      %cst_15 = arith.constant dense<0.000000e+00> : vector<16x128xf32>
      %22 = tpu.matmul %1, %21, %cst_15 {dimension_numbers = #tpu.dot_dimension_numbers<[1], [0], [0], [1], [0, 0, 1, 1], [], []>} : vector<16x16xbf16>, vector<16x128xbf16>, vector<16x128xf32> -> vector<16x128xf32>
      %c0_16 = arith.constant 0 : index
      %c0_17 = arith.constant 0 : index
      %23 = vector.load %arg2[%c0_16, %c0_17] : memref<16x128xf32, #tpu.memory_space<vmem>>, vector<16x128xf32>
      %24 = arith.addf %22, %23 : vector<16x128xf32>
      %cst_18 = arith.constant 0.000000e+00 : f32
      %25 = vector.broadcast %cst_18 : f32 to vector<16x128xf32>
      %26 = arith.maximumf %24, %25 : vector<16x128xf32>
      %27 = arith.truncf %26 : vector<16x128xf32> to vector<16x128xbf16>
      %cst_19 = arith.constant dense<0.000000e+00> : vector<16x128xf32>
      %28 = tpu.matmul %1, %27, %cst_19 {dimension_numbers = #tpu.dot_dimension_numbers<[1], [0], [0], [1], [0, 0, 1, 1], [], []>} : vector<16x16xbf16>, vector<16x128xbf16>, vector<16x128xf32> -> vector<16x128xf32>
      %c0_20 = arith.constant 0 : index
      %c0_21 = arith.constant 0 : index
      %29 = vector.load %arg2[%c0_20, %c0_21] : memref<16x128xf32, #tpu.memory_space<vmem>>, vector<16x128xf32>
      %30 = arith.addf %28, %29 : vector<16x128xf32>
      %cst_22 = arith.constant 0.000000e+00 : f32
      %31 = vector.broadcast %cst_22 : f32 to vector<16x128xf32>
      %32 = arith.maximumf %30, %31 : vector<16x128xf32>
      %33 = arith.truncf %32 : vector<16x128xf32> to vector<16x128xbf16>
      %cst_23 = arith.constant dense<0.000000e+00> : vector<16x128xf32>
      %34 = tpu.matmul %1, %33, %cst_23 {dimension_numbers = #tpu.dot_dimension_numbers<[1], [0], [0], [1], [0, 0, 1, 1], [], []>} : vector<16x16xbf16>, vector<16x128xbf16>, vector<16x128xf32> -> vector<16x128xf32>
      %c0_24 = arith.constant 0 : index
      %c0_25 = arith.constant 0 : index
      %35 = vector.load %arg2[%c0_24, %c0_25] : memref<16x128xf32, #tpu.memory_space<vmem>>, vector<16x128xf32>
      %36 = arith.addf %34, %35 : vector<16x128xf32>
      %cst_26 = arith.constant 0.000000e+00 : f32
      %37 = vector.broadcast %cst_26 : f32 to vector<16x128xf32>
      %38 = arith.maximumf %36, %37 : vector<16x128xf32>
      %39 = arith.truncf %38 : vector<16x128xf32> to vector<16x128xbf16>
      %cst_27 = arith.constant dense<0.000000e+00> : vector<16x128xf32>
      %40 = tpu.matmul %1, %39, %cst_27 {dimension_numbers = #tpu.dot_dimension_numbers<[1], [0], [0], [1], [0, 0, 1, 1], [], []>} : vector<16x16xbf16>, vector<16x128xbf16>, vector<16x128xf32> -> vector<16x128xf32>
      %c0_28 = arith.constant 0 : index
      %c0_29 = arith.constant 0 : index
      %41 = vector.load %arg2[%c0_28, %c0_29] : memref<16x128xf32, #tpu.memory_space<vmem>>, vector<16x128xf32>
      %42 = arith.addf %40, %41 : vector<16x128xf32>
      %cst_30 = arith.constant 0.000000e+00 : f32
      %43 = vector.broadcast %cst_30 : f32 to vector<16x128xf32>
      %44 = arith.maximumf %42, %43 : vector<16x128xf32>
      %45 = arith.truncf %44 : vector<16x128xf32> to vector<16x128xbf16>
      %cst_31 = arith.constant dense<0.000000e+00> : vector<16x128xf32>
      %46 = tpu.matmul %1, %45, %cst_31 {dimension_numbers = #tpu.dot_dimension_numbers<[1], [0], [0], [1], [0, 0, 1, 1], [], []>} : vector<16x16xbf16>, vector<16x128xbf16>, vector<16x128xf32> -> vector<16x128xf32>
      %c0_32 = arith.constant 0 : index
      %c0_33 = arith.constant 0 : index
      %47 = vector.load %arg2[%c0_32, %c0_33] : memref<16x128xf32, #tpu.memory_space<vmem>>, vector<16x128xf32>
      %48 = arith.addf %46, %47 : vector<16x128xf32>
      %cst_34 = arith.constant 0.000000e+00 : f32
      %49 = vector.broadcast %cst_34 : f32 to vector<16x128xf32>
      %50 = arith.maximumf %48, %49 : vector<16x128xf32>
      %51 = arith.truncf %50 : vector<16x128xf32> to vector<16x128xbf16>
      %cst_35 = arith.constant dense<0.000000e+00> : vector<16x128xf32>
      %52 = tpu.matmul %1, %51, %cst_35 {dimension_numbers = #tpu.dot_dimension_numbers<[1], [0], [0], [1], [0, 0, 1, 1], [], []>} : vector<16x16xbf16>, vector<16x128xbf16>, vector<16x128xf32> -> vector<16x128xf32>
      %c0_36 = arith.constant 0 : index
      %c0_37 = arith.constant 0 : index
      %53 = vector.load %arg2[%c0_36, %c0_37] : memref<16x128xf32, #tpu.memory_space<vmem>>, vector<16x128xf32>
      %54 = arith.addf %52, %53 : vector<16x128xf32>
      %cst_38 = arith.constant 0.000000e+00 : f32
      %55 = vector.broadcast %cst_38 : f32 to vector<16x128xf32>
      %56 = arith.maximumf %54, %55 : vector<16x128xf32>
      %cst_39 = arith.constant 0.000000e+00 : f32
      %57 = vector.broadcast %cst_39 : f32 to vector<1x1xf32>
      %cst_40 = arith.constant 0.000000e+00 : f32
      %58 = vector.broadcast %cst_40 : f32 to vector<1x1xf32>
      %59 = arith.subf %56, %arg5 : vector<16x128xf32>
      %60 = math.absf %59 : vector<16x128xf32>
      %cst_41 = arith.constant dense<0xFF800000> : vector<16xf32>
      %61 = vector.multi_reduction <maximumf>, %60, %cst_41 [1] : vector<16x128xf32> to vector<16xf32>
      %62 = vector.shape_cast %61 : vector<16xf32> to vector<16x1xf32>
      %63 = math.absf %56 : vector<16x128xf32>
      %cst_42 = arith.constant dense<0xFF800000> : vector<16xf32>
      %64 = vector.multi_reduction <maximumf>, %63, %cst_42 [1] : vector<16x128xf32> to vector<16xf32>
      %65 = vector.shape_cast %64 : vector<16xf32> to vector<16x1xf32>
      %cst_43 = arith.constant dense<0xFF800000> : vector<1xf32>
      %66 = vector.multi_reduction <maximumf>, %62, %cst_43 [0] : vector<16x1xf32> to vector<1xf32>
      %67 = vector.shape_cast %66 : vector<1xf32> to vector<1x1xf32>
      %68 = arith.maximumf %57, %67 : vector<1x1xf32>
      %cst_44 = arith.constant dense<0xFF800000> : vector<1xf32>
      %69 = vector.multi_reduction <maximumf>, %65, %cst_44 [0] : vector<16x1xf32> to vector<1xf32>
      %70 = vector.shape_cast %69 : vector<1xf32> to vector<1x1xf32>
      %71 = arith.maximumf %58, %70 : vector<1x1xf32>
      %c1_i32 = arith.constant 1 : i32
      %72 = arith.addi %arg4, %c1_i32 : i32
      scf.yield %72, %56, %68, %71 : i32, vector<16x128xf32>, vector<1x1xf32>, vector<1x1xf32>
    }
    %c0_5 = arith.constant 0 : index
    %c0_6 = arith.constant 0 : index
    %8 = vector.load %arg3[%c0_5, %c0_6] : memref<16x128xf32, #tpu.memory_space<vmem>>, vector<16x128xf32>
    tpu.vector_store %arg3[%c0_5, %c0_6], %7#1 {strides = array<i32>} : memref<16x128xf32, #tpu.memory_space<vmem>>, vector<16x128xf32>,
    return
  }
  func.func @transform_0(%arg0: i32) -> (i32, i32) {
    %c0_i32 = arith.constant 0 : i32
    %c0_i32_0 = arith.constant 0 : i32
    %c0_i32_1 = arith.constant 0 : i32
    return %c0_i32, %c0_i32_0 : i32, i32
  }
  func.func @transform_1(%arg0: i32) -> (i32, i32) {
    %c0_i32 = arith.constant 0 : i32
    %c0_i32_0 = arith.constant 0 : i32
    return %c0_i32, %arg0 : i32, i32
  }
  func.func @transform_2(%arg0: i32) -> (i32, i32) {
    %c0_i32 = arith.constant 0 : i32
    %c0_i32_0 = arith.constant 0 : i32
    return %c0_i32, %arg0 : i32, i32
  }
}

module attributes {stable_mosaic.version = 11 : i64} {
  func.func @_pgd_nnls_kernel(%arg0: i32, %arg1: memref<8x8xf32, #tpu.memory_space<vmem>>, %arg2: memref<8x128xf32, #tpu.memory_space<vmem>>, %arg3: memref<8x128xf32, #tpu.memory_space<vmem>>) attributes {dimension_semantics = [#tpu.dimension_semantics<parallel>], iteration_bounds = array<i64: 1>, scalar_prefetch = 0 : i64, scratch_operands = 0 : i64, tpu.core_type = #tpu.core_type<tc>, window_params = [{pipeline_mode = #tpu.pipeline_mode<synchronous>, transform_indices = @transform_0, window_bounds = array<i64: 8, 8>}, {transform_indices = @transform_1, window_bounds = array<i64: 8, 128>}, {transform_indices = @transform_2, window_bounds = array<i64: 8, 128>}]} {
    %c0 = arith.constant 0 : index
    %c0_0 = arith.constant 0 : index
    %0 = vector.load %arg1[%c0, %c0_0] : memref<8x8xf32, #tpu.memory_space<vmem>>, vector<8x8xf32>
    %1 = arith.truncf %0 : vector<8x8xf32> to vector<8x8xbf16>
    %c0_1 = arith.constant 0 : index
    %c0_2 = arith.constant 0 : index
    %2 = vector.load %arg2[%c0_1, %c0_2] : memref<8x128xf32, #tpu.memory_space<vmem>>, vector<8x128xf32>
    %cst = arith.constant 0.000000e+00 : f32
    %3 = vector.broadcast %cst : f32 to vector<8x128xf32>
    %4 = arith.maximumf %2, %3 : vector<8x128xf32>
    %cst_3 = arith.constant 0x7F800000 : f32
    %5 = vector.broadcast %cst_3 : f32 to vector<1x1xf32>
    %cst_4 = arith.constant 0.000000e+00 : f32
    %6 = vector.broadcast %cst_4 : f32 to vector<1x1xf32>
    %c0_i32 = arith.constant 0 : i32
    %7:4 = scf.while (%arg4 = %c0_i32, %arg5 = %4, %arg6 = %5, %arg7 = %6) : (i32, vector<8x128xf32>, vector<1x1xf32>, vector<1x1xf32>) -> (i32, vector<8x128xf32>, vector<1x1xf32>, vector<1x1xf32>) {
      %c125_i32 = arith.constant 125 : i32
      %9 = arith.cmpi slt, %arg4, %c125_i32 : i32
      %10 = vector.extract %arg6[0, 0] : f32 from vector<1x1xf32>
      %11 = vector.extract %arg7[0, 0] : f32 from vector<1x1xf32>
      %cst_7 = arith.constant 9.99999974E-5 : f32
      %12 = arith.mulf %cst_7, %11 : f32
      %cst_8 = arith.constant 9.99999971E-10 : f32
      %13 = arith.addf %12, %cst_8 : f32
      %14 = arith.cmpf ogt, %10, %13 : f32
      %15 = arith.andi %9, %14 : i1
      scf.condition(%15) %arg4, %arg5, %arg6, %arg7 : i32, vector<8x128xf32>, vector<1x1xf32>, vector<1x1xf32>
    } do {
    ^bb0(%arg4: i32, %arg5: vector<8x128xf32>, %arg6: vector<1x1xf32>, %arg7: vector<1x1xf32>):
      %9 = arith.truncf %arg5 : vector<8x128xf32> to vector<8x128xbf16>
      %cst_7 = arith.constant dense<0.000000e+00> : vector<8x128xf32>
      %10 = tpu.matmul %1, %9, %cst_7 {dimension_numbers = #tpu.dot_dimension_numbers<[1], [0], [0], [1], [0, 0, 1, 1], [], []>} : vector<8x8xbf16>, vector<8x128xbf16>, vector<8x128xf32> -> vector<8x128xf32>
      %c0_8 = arith.constant 0 : index
      %c0_9 = arith.constant 0 : index
      %11 = vector.load %arg2[%c0_8, %c0_9] : memref<8x128xf32, #tpu.memory_space<vmem>>, vector<8x128xf32>
      %12 = arith.addf %10, %11 : vector<8x128xf32>
      %cst_10 = arith.constant 0.000000e+00 : f32
      %13 = vector.broadcast %cst_10 : f32 to vector<8x128xf32>
      %14 = arith.maximumf %12, %13 : vector<8x128xf32>
      %15 = arith.truncf %14 : vector<8x128xf32> to vector<8x128xbf16>
      %cst_11 = arith.constant dense<0.000000e+00> : vector<8x128xf32>
      %16 = tpu.matmul %1, %15, %cst_11 {dimension_numbers = #tpu.dot_dimension_numbers<[1], [0], [0], [1], [0, 0, 1, 1], [], []>} : vector<8x8xbf16>, vector<8x128xbf16>, vector<8x128xf32> -> vector<8x128xf32>
      %c0_12 = arith.constant 0 : index
      %c0_13 = arith.constant 0 : index
      %17 = vector.load %arg2[%c0_12, %c0_13] : memref<8x128xf32, #tpu.memory_space<vmem>>, vector<8x128xf32>
      %18 = arith.addf %16, %17 : vector<8x128xf32>
      %cst_14 = arith.constant 0.000000e+00 : f32
      %19 = vector.broadcast %cst_14 : f32 to vector<8x128xf32>
      %20 = arith.maximumf %18, %19 : vector<8x128xf32>
      %21 = arith.truncf %20 : vector<8x128xf32> to vector<8x128xbf16>
      %cst_15 = arith.constant dense<0.000000e+00> : vector<8x128xf32>
      %22 = tpu.matmul %1, %21, %cst_15 {dimension_numbers = #tpu.dot_dimension_numbers<[1], [0], [0], [1], [0, 0, 1, 1], [], []>} : vector<8x8xbf16>, vector<8x128xbf16>, vector<8x128xf32> -> vector<8x128xf32>
      %c0_16 = arith.constant 0 : index
      %c0_17 = arith.constant 0 : index
      %23 = vector.load %arg2[%c0_16, %c0_17] : memref<8x128xf32, #tpu.memory_space<vmem>>, vector<8x128xf32>
      %24 = arith.addf %22, %23 : vector<8x128xf32>
      %cst_18 = arith.constant 0.000000e+00 : f32
      %25 = vector.broadcast %cst_18 : f32 to vector<8x128xf32>
      %26 = arith.maximumf %24, %25 : vector<8x128xf32>
      %27 = arith.truncf %26 : vector<8x128xf32> to vector<8x128xbf16>
      %cst_19 = arith.constant dense<0.000000e+00> : vector<8x128xf32>
      %28 = tpu.matmul %1, %27, %cst_19 {dimension_numbers = #tpu.dot_dimension_numbers<[1], [0], [0], [1], [0, 0, 1, 1], [], []>} : vector<8x8xbf16>, vector<8x128xbf16>, vector<8x128xf32> -> vector<8x128xf32>
      %c0_20 = arith.constant 0 : index
      %c0_21 = arith.constant 0 : index
      %29 = vector.load %arg2[%c0_20, %c0_21] : memref<8x128xf32, #tpu.memory_space<vmem>>, vector<8x128xf32>
      %30 = arith.addf %28, %29 : vector<8x128xf32>
      %cst_22 = arith.constant 0.000000e+00 : f32
      %31 = vector.broadcast %cst_22 : f32 to vector<8x128xf32>
      %32 = arith.maximumf %30, %31 : vector<8x128xf32>
      %33 = arith.truncf %32 : vector<8x128xf32> to vector<8x128xbf16>
      %cst_23 = arith.constant dense<0.000000e+00> : vector<8x128xf32>
      %34 = tpu.matmul %1, %33, %cst_23 {dimension_numbers = #tpu.dot_dimension_numbers<[1], [0], [0], [1], [0, 0, 1, 1], [], []>} : vector<8x8xbf16>, vector<8x128xbf16>, vector<8x128xf32> -> vector<8x128xf32>
      %c0_24 = arith.constant 0 : index
      %c0_25 = arith.constant 0 : index
      %35 = vector.load %arg2[%c0_24, %c0_25] : memref<8x128xf32, #tpu.memory_space<vmem>>, vector<8x128xf32>
      %36 = arith.addf %34, %35 : vector<8x128xf32>
      %cst_26 = arith.constant 0.000000e+00 : f32
      %37 = vector.broadcast %cst_26 : f32 to vector<8x128xf32>
      %38 = arith.maximumf %36, %37 : vector<8x128xf32>
      %39 = arith.truncf %38 : vector<8x128xf32> to vector<8x128xbf16>
      %cst_27 = arith.constant dense<0.000000e+00> : vector<8x128xf32>
      %40 = tpu.matmul %1, %39, %cst_27 {dimension_numbers = #tpu.dot_dimension_numbers<[1], [0], [0], [1], [0, 0, 1, 1], [], []>} : vector<8x8xbf16>, vector<8x128xbf16>, vector<8x128xf32> -> vector<8x128xf32>
      %c0_28 = arith.constant 0 : index
      %c0_29 = arith.constant 0 : index
      %41 = vector.load %arg2[%c0_28, %c0_29] : memref<8x128xf32, #tpu.memory_space<vmem>>, vector<8x128xf32>
      %42 = arith.addf %40, %41 : vector<8x128xf32>
      %cst_30 = arith.constant 0.000000e+00 : f32
      %43 = vector.broadcast %cst_30 : f32 to vector<8x128xf32>
      %44 = arith.maximumf %42, %43 : vector<8x128xf32>
      %45 = arith.truncf %44 : vector<8x128xf32> to vector<8x128xbf16>
      %cst_31 = arith.constant dense<0.000000e+00> : vector<8x128xf32>
      %46 = tpu.matmul %1, %45, %cst_31 {dimension_numbers = #tpu.dot_dimension_numbers<[1], [0], [0], [1], [0, 0, 1, 1], [], []>} : vector<8x8xbf16>, vector<8x128xbf16>, vector<8x128xf32> -> vector<8x128xf32>
      %c0_32 = arith.constant 0 : index
      %c0_33 = arith.constant 0 : index
      %47 = vector.load %arg2[%c0_32, %c0_33] : memref<8x128xf32, #tpu.memory_space<vmem>>, vector<8x128xf32>
      %48 = arith.addf %46, %47 : vector<8x128xf32>
      %cst_34 = arith.constant 0.000000e+00 : f32
      %49 = vector.broadcast %cst_34 : f32 to vector<8x128xf32>
      %50 = arith.maximumf %48, %49 : vector<8x128xf32>
      %51 = arith.truncf %50 : vector<8x128xf32> to vector<8x128xbf16>
      %cst_35 = arith.constant dense<0.000000e+00> : vector<8x128xf32>
      %52 = tpu.matmul %1, %51, %cst_35 {dimension_numbers = #tpu.dot_dimension_numbers<[1], [0], [0], [1], [0, 0, 1, 1], [], []>} : vector<8x8xbf16>, vector<8x128xbf16>, vector<8x128xf32> -> vector<8x128xf32>
      %c0_36 = arith.constant 0 : index
      %c0_37 = arith.constant 0 : index
      %53 = vector.load %arg2[%c0_36, %c0_37] : memref<8x128xf32, #tpu.memory_space<vmem>>, vector<8x128xf32>
      %54 = arith.addf %52, %53 : vector<8x128xf32>
      %cst_38 = arith.constant 0.000000e+00 : f32
      %55 = vector.broadcast %cst_38 : f32 to vector<8x128xf32>
      %56 = arith.maximumf %54, %55 : vector<8x128xf32>
      %cst_39 = arith.constant 0.000000e+00 : f32
      %57 = vector.broadcast %cst_39 : f32 to vector<1x1xf32>
      %cst_40 = arith.constant 0.000000e+00 : f32
      %58 = vector.broadcast %cst_40 : f32 to vector<1x1xf32>
      %59 = arith.subf %56, %arg5 : vector<8x128xf32>
      %60 = math.absf %59 : vector<8x128xf32>
      %cst_41 = arith.constant dense<0xFF800000> : vector<8xf32>
      %61 = vector.multi_reduction <maximumf>, %60, %cst_41 [1] : vector<8x128xf32> to vector<8xf32>
      %62 = vector.shape_cast %61 : vector<8xf32> to vector<8x1xf32>
      %63 = math.absf %56 : vector<8x128xf32>
      %cst_42 = arith.constant dense<0xFF800000> : vector<8xf32>
      %64 = vector.multi_reduction <maximumf>, %63, %cst_42 [1] : vector<8x128xf32> to vector<8xf32>
      %65 = vector.shape_cast %64 : vector<8xf32> to vector<8x1xf32>
      %cst_43 = arith.constant dense<0xFF800000> : vector<1xf32>
      %66 = vector.multi_reduction <maximumf>, %62, %cst_43 [0] : vector<8x1xf32> to vector<1xf32>
      %67 = vector.shape_cast %66 : vector<1xf32> to vector<1x1xf32>
      %68 = arith.maximumf %57, %67 : vector<1x1xf32>
      %cst_44 = arith.constant dense<0xFF800000> : vector<1xf32>
      %69 = vector.multi_reduction <maximumf>, %65, %cst_44 [0] : vector<8x1xf32> to vector<1xf32>
      %70 = vector.shape_cast %69 : vector<1xf32> to vector<1x1xf32>
      %71 = arith.maximumf %58, %70 : vector<1x1xf32>
      %c1_i32 = arith.constant 1 : i32
      %72 = arith.addi %arg4, %c1_i32 : i32
      scf.yield %72, %56, %68, %71 : i32, vector<8x128xf32>, vector<1x1xf32>, vector<1x1xf32>
    }
    %c0_5 = arith.constant 0 : index
    %c0_6 = arith.constant 0 : index
    %8 = vector.load %arg3[%c0_5, %c0_6] : memref<8x128xf32, #tpu.memory_space<vmem>>, vector<8x128xf32>
    tpu.vector_store %arg3[%c0_5, %c0_6], %7#1 {strides = array<i32>} : memref<8x128xf32, #tpu.memory_space<vmem>>, vector<8x128xf32>,
    return
  }
  func.func @transform_0(%arg0: i32) -> (i32, i32) {
    %c0_i32 = arith.constant 0 : i32
    %c0_i32_0 = arith.constant 0 : i32
    %c0_i32_1 = arith.constant 0 : i32
    return %c0_i32, %c0_i32_0 : i32, i32
  }
  func.func @transform_1(%arg0: i32) -> (i32, i32) {
    %c0_i32 = arith.constant 0 : i32
    %c0_i32_0 = arith.constant 0 : i32
    return %c0_i32, %arg0 : i32, i32
  }
  func.func @transform_2(%arg0: i32) -> (i32, i32) {
    %c0_i32 = arith.constant 0 : i32
    %c0_i32_0 = arith.constant 0 : i32
    return %c0_i32, %arg0 : i32, i32
  }
}

</mosaic_0001>

<llo_original>
// kernel: custom-call
$region0: #{custom-call}
  %s0 = inlined_call_operand.vmem [shape: f32[16], index: 0, kind: output, shape index: {}]

// kernel: custom-call.1
$region0: #{custom-call.1}
  %s0 = inlined_call_operand.vmem [shape: f32[8], index: 0, kind: output, shape index: {}]

// kernel: _forward_jit.3
$region0: #{_forward_jit.3}
  #allocation0 [shape = 'u32[]', space=smem, size = 0x4, offset = 0x4, fixed_abs, tag = 'smem constant byte address 0x4 - core index']
  #allocation1 [shape = 'u32[144,128]{1,0:T(1,128)}', space=vmem, size = 0x12000, scoped, tag = 'internal scratch']
  %s0 = inlined_call_operand.vmem [shape: f32[8,8], index: 0, kind: input, shape index: {}]
  %s1 = inlined_call_operand.vmem [shape: f32[8,128], index: 1, kind: input, shape index: {}]
  %s2 = inlined_call_operand.hbm [shape: f32[8,128], index: 2, kind: output, shape index: {}]
  %s3 = sld [smem:[#allocation0]]
  $region25: #{_forward_jit.3} parent=0
    _
  %s5 = ssub.s32 1, %s3
  %s6 = scalar_select 0, %s5, %s3
  $region1: #{_forward_jit.3} parent=0
    #allocation2 [shape = 'u8[4096]{0}', space=vmem, size = 0x1000, scoped, tag = 'output window, operand 0, single buffered']
    #allocation3 [shape = 's32[1]{0}', space=sflag, size = 0x4, scoped, tag = 'scoped memory for _forward_jit.3']
    %7 = vsyncpa [#allocation3], 0
    // Predicated region
    $region2: #{_forward_jit.3} parent=1 // pred_check
      _
    $region3: #{_forward_jit.3} parent=1 // pred_check_branch
      %9 = sbr.rel (0) target = $region5
    $region4: #{_forward_jit.3} parent=1 // pred_region
      _
    $region5: #{_forward_jit.3} parent=1 // pred_fallthru
      _
    // Predicated region
    $region6: #{_forward_jit.3} parent=1 // pred_check
      _
    $region7: #{_forward_jit.3} parent=1 // pred_check_branch
      %11 = sbr.rel (0) target = $region9
    $region8: #{_forward_jit.3} parent=1 // pred_region
      _
    $region9: #{_forward_jit.3} parent=1 // pred_fallthru
      _
    %v13 = vld [vmem:[%s0] sm:$0xff]
    %v14 = vpack.c.bf16 %v13, %v13
    %v15 = vld [vmem:[%s1] sm:$0xff]
    %v16 = vmax.f32 %v15, 0.0
    // While loop
    $region10: #{_forward_jit.3} parent=1 // loop_pre_header
      _
    $region11: #{_forward_jit.3} parent=1 // loop_header
      %s18 = sphi 0, %s419
      %v19 = vphi %v16, %v397
      %v20 = vphi inf, %v411
      %v21 = vphi 0.0, %v418
      %p22 = scmp.lt.s32.totalorder %s18, 125
      %s23 = vtos %v20
      %s24 = vtos %v21
      %s25 = smul.f32 %s24, 0.0001
      %s26 = sadd.f32 %s25, 1e-09
      %p27 = scmp.gt.f32.partialorder %s23, %s26
      %p28 = pnand %p22, %p27
      %p29 = pneg %p28
    $region12: #{_forward_jit.3} parent=1 // loop_header_branch
      %31 = sbr.rel (%p28) target = $region16
    $region13: #{_forward_jit.3} parent=1 // loop_body
      %v32 = vpack.c.bf16 %v19, %v19
      %v33 = vld [vmem:[%s1] sm:$0xff]
      %vm34 = vcmask 64512
      %v36 = vsel %vm34, %v14, 0
      %vm38 = vcmask 1043456
      %v40 = vsel %vm38, %v32, 0
      %42 = vmatprep.subr.bf16.mxu0 0
      %43 = vmatpush1.bf16.msra.mxu0 0
      %44 = vmatprep.subr.bf16.mxu0 0
      %45 = vmatpush1.bf16.msra.mxu0 0
      %46 = vmatprep.subr.bf16.mxu0 0
      %47 = vmatpush1.bf16.msra.mxu0 0
      %48 = vmatprep.subr.bf16.mxu0 0
      %49 = vmatpush1.bf16.msra.mxu0 0
      %50 = vmatprep.subr.bf16.mxu0 0
      %51 = vmatpush1.bf16.msra.mxu0 0
      %52 = vmatprep.subr.bf16.mxu0 0
      %53 = vmatpush1.bf16.msra.mxu0 0
      %54 = vmatprep.subr.bf16.mxu0 0
      %55 = vmatpush1.bf16.msra.mxu0 0
      %56 = vmatprep.subr.bf16.mxu0 0
      %57 = vmatpush1.bf16.msra.mxu0 %v40
      %58 = vmatprep.subr.bf16.mxu0 0
      %59 = vmatpush2.bf16.msra.mxu0 0
      %60 = vmatprep.subr.bf16.mxu0 0
      %61 = vmatpush2.bf16.msra.mxu0 0
      %62 = vmatprep.subr.bf16.mxu0 0
      %63 = vmatpush2.bf16.msra.mxu0 0
      %64 = vmatprep.subr.bf16.mxu0 0
      %65 = vmatpush2.bf16.msra.mxu0 0
      %66 = vmatprep.subr.bf16.mxu0 0
      %67 = vmatpush2.bf16.msra.mxu0 0
      %68 = vmatprep.subr.bf16.mxu0 0
      %69 = vmatpush2.bf16.msra.mxu0 0
      %70 = vmatprep.subr.bf16.mxu0 0
      %71 = vmatpush2.bf16.msra.mxu0 0
      %72 = vmatprep.subr.bf16.mxu0 0
      %73 = vmatpush2.bf16.msra.mxu0 0
      %74 = vmatprep.mubr.bf16.mxu0 0
      %75 = vmatmul.mubr.bf16.gmra.mxu0 %v36
      %v76 = vpop.f32.mrf.mxu0
      %v77 = vadd.f32 %v33, %v76
      %v78 = vpop.f32.mrf.mxu0
      %v79 = vpop.f32.mrf.mxu0
      %v80 = vpop.f32.mrf.mxu0
      %81 = vdwg.mxu0
      %v82 = vmax.f32 %v77, 0.0
      %v83 = vpack.c.bf16 %v82, %v82
      %v85 = vsel %vm38, %v83, 0
      %87 = vmatprep.subr.bf16.mxu0 0
      %88 = vmatpush1.bf16.msra.mxu0 0
      %89 = vmatprep.subr.bf16.mxu0 0
      %90 = vmatpush1.bf16.msra.mxu0 0
      %91 = vmatprep.subr.bf16.mxu0 0
      %92 = vmatpush1.bf16.msra.mxu0 0
      %93 = vmatprep.subr.bf16.mxu0 0
      %94 = vmatpush1.bf16.msra.mxu0 0
      %95 = vmatprep.subr.bf16.mxu0 0
      %96 = vmatpush1.bf16.msra.mxu0 0
      %97 = vmatprep.subr.bf16.mxu0 0
      %98 = vmatpush1.bf16.msra.mxu0 0
      %99 = vmatprep.subr.bf16.mxu0 0
      %100 = vmatpush1.bf16.msra.mxu0 0
      %101 = vmatprep.subr.bf16.mxu0 0
      %102 = vmatpush1.bf16.msra.mxu0 %v85
      %103 = vmatprep.subr.bf16.mxu0 0
      %104 = vmatpush2.bf16.msra.mxu0 0
      %105 = vmatprep.subr.bf16.mxu0 0
      %106 = vmatpush2.bf16.msra.mxu0 0
      %107 = vmatprep.subr.bf16.mxu0 0
      %108 = vmatpush2.bf16.msra.mxu0 0
      %109 = vmatprep.subr.bf16.mxu0 0
      %110 = vmatpush2.bf16.msra.mxu0 0
      %111 = vmatprep.subr.bf16.mxu0 0
      %112 = vmatpush2.bf16.msra.mxu0 0
      %113 = vmatprep.subr.bf16.mxu0 0
      %114 = vmatpush2.bf16.msra.mxu0 0
      %115 = vmatprep.subr.bf16.mxu0 0
      %116 = vmatpush2.bf16.msra.mxu0 0
      %117 = vmatprep.subr.bf16.mxu0 0
      %118 = vmatpush2.bf16.msra.mxu0 0
      %119 = vmatprep.mubr.bf16.mxu0 0
      %120 = vmatmul.mubr.bf16.gmra.mxu0 %v36
      %v121 = vpop.f32.mrf.mxu0
      %v122 = vadd.f32 %v33, %v121
      %v123 = vpop.f32.mrf.mxu0
      %v124 = vpop.f32.mrf.mxu0
      %v125 = vpop.f32.mrf.mxu0
      %126 = vdwg.mxu0
      %v127 = vmax.f32 %v122, 0.0
      %v128 = vpack.c.bf16 %v127, %v127
      %v130 = vsel %vm38, %v128, 0
      %132 = vmatprep.subr.bf16.mxu0 0
      %133 = vmatpush1.bf16.msra.mxu0 0
      %134 = vmatprep.subr.bf16.mxu0 0
      %135 = vmatpush1.bf16.msra.mxu0 0
      %136 = vmatprep.subr.bf16.mxu0 0
      %137 = vmatpush1.bf16.msra.mxu0 0
      %138 = vmatprep.subr.bf16.mxu0 0
      %139 = vmatpush1.bf16.msra.mxu0 0
      %140 = vmatprep.subr.bf16.mxu0 0
      %141 = vmatpush1.bf16.msra.mxu0 0
      %142 = vmatprep.subr.bf16.mxu0 0
      %143 = vmatpush1.bf16.msra.mxu0 0
      %144 = vmatprep.subr.bf16.mxu0 0
      %145 = vmatpush1.bf16.msra.mxu0 0
      %146 = vmatprep.subr.bf16.mxu0 0
      %147 = vmatpush1.bf16.msra.mxu0 %v130
      %148 = vmatprep.subr.bf16.mxu0 0
      %149 = vmatpush2.bf16.msra.mxu0 0
      %150 = vmatprep.subr.bf16.mxu0 0
      %151 = vmatpush2.bf16.msra.mxu0 0
      %152 = vmatprep.subr.bf16.mxu0 0
      %153 = vmatpush2.bf16.msra.mxu0 0
      %154 = vmatprep.subr.bf16.mxu0 0
      %155 = vmatpush2.bf16.msra.mxu0 0
      %156 = vmatprep.subr.bf16.mxu0 0
      %157 = vmatpush2.bf16.msra.mxu0 0
      %158 = vmatprep.subr.bf16.mxu0 0
      %159 = vmatpush2.bf16.msra.mxu0 0
      %160 = vmatprep.subr.bf16.mxu0 0
      %161 = vmatpush2.bf16.msra.mxu0 0
      %162 = vmatprep.subr.bf16.mxu0 0
      %163 = vmatpush2.bf16.msra.mxu0 0
      %164 = vmatprep.mubr.bf16.mxu0 0
      %165 = vmatmul.mubr.bf16.gmra.mxu0 %v36
      %v166 = vpop.f32.mrf.mxu0
      %v167 = vadd.f32 %v33, %v166
      %v168 = vpop.f32.mrf.mxu0
      %v169 = vpop.f32.mrf.mxu0
      %v170 = vpop.f32.mrf.mxu0
      %171 = vdwg.mxu0
      %v172 = vmax.f32 %v167, 0.0
      %v173 = vpack.c.bf16 %v172, %v172
      %v175 = vsel %vm38, %v173, 0
      %177 = vmatprep.subr.bf16.mxu0 0
      %178 = vmatpush1.bf16.msra.mxu0 0
      %179 = vmatprep.subr.bf16.mxu0 0
      %180 = vmatpush1.bf16.msra.mxu0 0
      %181 = vmatprep.subr.bf16.mxu0 0
      %182 = vmatpush1.bf16.msra.mxu0 0
      %183 = vmatprep.subr.bf16.mxu0 0
      %184 = vmatpush1.bf16.msra.mxu0 0
      %185 = vmatprep.subr.bf16.mxu0 0
      %186 = vmatpush1.bf16.msra.mxu0 0
      %187 = vmatprep.subr.bf16.mxu0 0
      %188 = vmatpush1.bf16.msra.mxu0 0
      %189 = vmatprep.subr.bf16.mxu0 0
      %190 = vmatpush1.bf16.msra.mxu0 0
      %191 = vmatprep.subr.bf16.mxu0 0
      %192 = vmatpush1.bf16.msra.mxu0 %v175
      %193 = vmatprep.subr.bf16.mxu0 0
      %194 = vmatpush2.bf16.msra.mxu0 0
      %195 = vmatprep.subr.bf16.mxu0 0
      %196 = vmatpush2.bf16.msra.mxu0 0
      %197 = vmatprep.subr.bf16.mxu0 0
      %198 = vmatpush2.bf16.msra.mxu0 0
      %199 = vmatprep.subr.bf16.mxu0 0
      %200 = vmatpush2.bf16.msra.mxu0 0
      %201 = vmatprep.subr.bf16.mxu0 0
      %202 = vmatpush2.bf16.msra.mxu0 0
      %203 = vmatprep.subr.bf16.mxu0 0
      %204 = vmatpush2.bf16.msra.mxu0 0
      %205 = vmatprep.subr.bf16.mxu0 0
      %206 = vmatpush2.bf16.msra.mxu0 0
      %207 = vmatprep.subr.bf16.mxu0 0
      %208 = vmatpush2.bf16.msra.mxu0 0
      %209 = vmatprep.mubr.bf16.mxu0 0
      %210 = vmatmul.mubr.bf16.gmra.mxu0 %v36
      %v211 = vpop.f32.mrf.mxu0
      %v212 = vadd.f32 %v33, %v211
      %v213 = vpop.f32.mrf.mxu0
      %v214 = vpop.f32.mrf.mxu0
      %v215 = vpop.f32.mrf.mxu0
      %216 = vdwg.mxu0
      %v217 = vmax.f32 %v212, 0.0
      %v218 = vpack.c.bf16 %v217, %v217
      %v220 = vsel %vm38, %v218, 0
      %222 = vmatprep.subr.bf16.mxu0 0
      %223 = vmatpush1.bf16.msra.mxu0 0
      %224 = vmatprep.subr.bf16.mxu0 0
      %225 = vmatpush1.bf16.msra.mxu0 0
      %226 = vmatprep.subr.bf16.mxu0 0
      %227 = vmatpush1.bf16.msra.mxu0 0
      %228 = vmatprep.subr.bf16.mxu0 0
      %229 = vmatpush1.bf16.msra.mxu0 0
      %230 = vmatprep.subr.bf16.mxu0 0
      %231 = vmatpush1.bf16.msra.mxu0 0
      %232 = vmatprep.subr.bf16.mxu0 0
      %233 = vmatpush1.bf16.msra.mxu0 0
      %234 = vmatprep.subr.bf16.mxu0 0
      %235 = vmatpush1.bf16.msra.mxu0 0
      %236 = vmatprep.subr.bf16.mxu0 0
      %237 = vmatpush1.bf16.msra.mxu0 %v220
      %238 = vmatprep.subr.bf16.mxu0 0
      %239 = vmatpush2.bf16.msra.mxu0 0
      %240 = vmatprep.subr.bf16.mxu0 0
      %241 = vmatpush2.bf16.msra.mxu0 0
      %242 = vmatprep.subr.bf16.mxu0 0
      %243 = vmatpush2.bf16.msra.mxu0 0
      %244 = vmatprep.subr.bf16.mxu0 0
      %245 = vmatpush2.bf16.msra.mxu0 0
      %246 = vmatprep.subr.bf16.mxu0 0
      %247 = vmatpush2.bf16.msra.mxu0 0
      %248 = vmatprep.subr.bf16.mxu0 0
      %249 = vmatpush2.bf16.msra.mxu0 0
      %250 = vmatprep.subr.bf16.mxu0 0
      %251 = vmatpush2.bf16.msra.mxu0 0
      %252 = vmatprep.subr.bf16.mxu0 0
      %253 = vmatpush2.bf16.msra.mxu0 0
      %254 = vmatprep.mubr.bf16.mxu0 0
      %255 = vmatmul.mubr.bf16.gmra.mxu0 %v36
      %v256 = vpop.f32.mrf.mxu0
      %v257 = vadd.f32 %v33, %v256
      %v258 = vpop.f32.mrf.mxu0
      %v259 = vpop.f32.mrf.mxu0
      %v260 = vpop.f32.mrf.mxu0
      %261 = vdwg.mxu0
      %v262 = vmax.f32 %v257, 0.0
      %v263 = vpack.c.bf16 %v262, %v262
      %v265 = vsel %vm38, %v263, 0
      %267 = vmatprep.subr.bf16.mxu0 0
      %268 = vmatpush1.bf16.msra.mxu0 0
      %269 = vmatprep.subr.bf16.mxu0 0
      %270 = vmatpush1.bf16.msra.mxu0 0
      %271 = vmatprep.subr.bf16.mxu0 0
      %272 = vmatpush1.bf16.msra.mxu0 0
      %273 = vmatprep.subr.bf16.mxu0 0
      %274 = vmatpush1.bf16.msra.mxu0 0
      %275 = vmatprep.subr.bf16.mxu0 0
      %276 = vmatpush1.bf16.msra.mxu0 0
      %277 = vmatprep.subr.bf16.mxu0 0
      %278 = vmatpush1.bf16.msra.mxu0 0
      %279 = vmatprep.subr.bf16.mxu0 0
      %280 = vmatpush1.bf16.msra.mxu0 0
      %281 = vmatprep.subr.bf16.mxu0 0
      %282 = vmatpush1.bf16.msra.mxu0 %v265
      %283 = vmatprep.subr.bf16.mxu0 0
      %284 = vmatpush2.bf16.msra.mxu0 0
      %285 = vmatprep.subr.bf16.mxu0 0
      %286 = vmatpush2.bf16.msra.mxu0 0
      %287 = vmatprep.subr.bf16.mxu0 0
      %288 = vmatpush2.bf16.msra.mxu0 0
      %289 = vmatprep.subr.bf16.mxu0 0
      %290 = vmatpush2.bf16.msra.mxu0 0
      %291 = vmatprep.subr.bf16.mxu0 0
      %292 = vmatpush2.bf16.msra.mxu0 0
      %293 = vmatprep.subr.bf16.mxu0 0
      %294 = vmatpush2.bf16.msra.mxu0 0
      %295 = vmatprep.subr.bf16.mxu0 0
      %296 = vmatpush2.bf16.msra.mxu0 0
      %297 = vmatprep.subr.bf16.mxu0 0
      %298 = vmatpush2.bf16.msra.mxu0 0
      %299 = vmatprep.mubr.bf16.mxu0 0
      %300 = vmatmul.mubr.bf16.gmra.mxu0 %v36
      %v301 = vpop.f32.mrf.mxu0
      %v302 = vadd.f32 %v33, %v301
      %v303 = vpop.f32.mrf.mxu0
      %v304 = vpop.f32.mrf.mxu0
      %v305 = vpop.f32.mrf.mxu0
      %306 = vdwg.mxu0
      %v307 = vmax.f32 %v302, 0.0
      %v308 = vpack.c.bf16 %v307, %v307
      %v310 = vsel %vm38, %v308, 0
      %312 = vmatprep.subr.bf16.mxu0 0
      %313 = vmatpush1.bf16.msra.mxu0 0
      %314 = vmatprep.subr.bf16.mxu0 0
      %315 = vmatpush1.bf16.msra.mxu0 0
      %316 = vmatprep.subr.bf16.mxu0 0
      %317 = vmatpush1.bf16.msra.mxu0 0
      %318 = vmatprep.subr.bf16.mxu0 0
      %319 = vmatpush1.bf16.msra.mxu0 0
      %320 = vmatprep.subr.bf16.mxu0 0
      %321 = vmatpush1.bf16.msra.mxu0 0
      %322 = vmatprep.subr.bf16.mxu0 0
      %323 = vmatpush1.bf16.msra.mxu0 0
      %324 = vmatprep.subr.bf16.mxu0 0
      %325 = vmatpush1.bf16.msra.mxu0 0
      %326 = vmatprep.subr.bf16.mxu0 0
      %327 = vmatpush1.bf16.msra.mxu0 %v310
      %328 = vmatprep.subr.bf16.mxu0 0
      %329 = vmatpush2.bf16.msra.mxu0 0
      %330 = vmatprep.subr.bf16.mxu0 0
      %331 = vmatpush2.bf16.msra.mxu0 0
      %332 = vmatprep.subr.bf16.mxu0 0
      %333 = vmatpush2.bf16.msra.mxu0 0
      %334 = vmatprep.subr.bf16.mxu0 0
      %335 = vmatpush2.bf16.msra.mxu0 0
      %336 = vmatprep.subr.bf16.mxu0 0
      %337 = vmatpush2.bf16.msra.mxu0 0
      %338 = vmatprep.subr.bf16.mxu0 0
      %339 = vmatpush2.bf16.msra.mxu0 0
      %340 = vmatprep.subr.bf16.mxu0 0
      %341 = vmatpush2.bf16.msra.mxu0 0
      %342 = vmatprep.subr.bf16.mxu0 0
      %343 = vmatpush2.bf16.msra.mxu0 0
      %344 = vmatprep.mubr.bf16.mxu0 0
      %345 = vmatmul.mubr.bf16.gmra.mxu0 %v36
      %v346 = vpop.f32.mrf.mxu0
      %v347 = vadd.f32 %v33, %v346
      %v348 = vpop.f32.mrf.mxu0
      %v349 = vpop.f32.mrf.mxu0
      %v350 = vpop.f32.mrf.mxu0
      %351 = vdwg.mxu0
      %v352 = vmax.f32 %v347, 0.0
      %v353 = vpack.c.bf16 %v352, %v352
      %v355 = vsel %vm38, %v353, 0
      %357 = vmatprep.subr.bf16.mxu0 0
      %358 = vmatpush1.bf16.msra.mxu0 0
      %359 = vmatprep.subr.bf16.mxu0 0
      %360 = vmatpush1.bf16.msra.mxu0 0
      %361 = vmatprep.subr.bf16.mxu0 0
      %362 = vmatpush1.bf16.msra.mxu0 0
      %363 = vmatprep.subr.bf16.mxu0 0
      %364 = vmatpush1.bf16.msra.mxu0 0
      %365 = vmatprep.subr.bf16.mxu0 0
      %366 = vmatpush1.bf16.msra.mxu0 0
      %367 = vmatprep.subr.bf16.mxu0 0
      %368 = vmatpush1.bf16.msra.mxu0 0
      %369 = vmatprep.subr.bf16.mxu0 0
      %370 = vmatpush1.bf16.msra.mxu0 0
      %371 = vmatprep.subr.bf16.mxu0 0
      %372 = vmatpush1.bf16.msra.mxu0 %v355
      %373 = vmatprep.subr.bf16.mxu0 0
      %374 = vmatpush2.bf16.msra.mxu0 0
      %375 = vmatprep.subr.bf16.mxu0 0
      %376 = vmatpush2.bf16.msra.mxu0 0
      %377 = vmatprep.subr.bf16.mxu0 0
      %378 = vmatpush2.bf16.msra.mxu0 0
      %379 = vmatprep.subr.bf16.mxu0 0
      %380 = vmatpush2.bf16.msra.mxu0 0
      %381 = vmatprep.subr.bf16.mxu0 0
      %382 = vmatpush2.bf16.msra.mxu0 0
      %383 = vmatprep.subr.bf16.mxu0 0
      %384 = vmatpush2.bf16.msra.mxu0 0
      %385 = vmatprep.subr.bf16.mxu0 0
      %386 = vmatpush2.bf16.msra.mxu0 0
      %387 = vmatprep.subr.bf16.mxu0 0
      %388 = vmatpush2.bf16.msra.mxu0 0
      %389 = vmatprep.mubr.bf16.mxu0 0
      %390 = vmatmul.mubr.bf16.gmra.mxu0 %v36
      %v391 = vpop.f32.mrf.mxu0
      %v392 = vadd.f32 %v33, %v391
      %v393 = vpop.f32.mrf.mxu0
      %v394 = vpop.f32.mrf.mxu0
      %v395 = vpop.f32.mrf.mxu0
      %396 = vdwg.mxu0
      %v397 = vmax.f32 %v392, 0.0
      %v398 = vsub.f32 %v397, %v19
      %v399 = vand.u32 2147483647, %v398
      %400 = vmax.xlane.f32.xlu0 %v399
      %v401 = vpop.xlane.xlu0 %400
      %v402 = vand.u32 2147483647, %v397
      %403 = vmax.xlane.f32.xlu0 %v402
      %v404 = vpop.xlane.xlu0 %403
      %v405 = vrot.slane %v401, 4
      %v406 = vmax.f32 %v401, %v405
      %v407 = vrot.slane %v406, 2
      %v408 = vmax.f32 %v406, %v407
      %v409 = vrot.slane %v408, 1
      %v410 = vmax.f32 %v408, %v409
      %v411 = vmax.f32 %v410, 0.0
      %v412 = vrot.slane %v404, 4
      %v413 = vmax.f32 %v404, %v412
      %v414 = vrot.slane %v413, 2
      %v415 = vmax.f32 %v413, %v414
      %v416 = vrot.slane %v415, 1
      %v417 = vmax.f32 %v415, %v416
      %v418 = vmax.f32 %v417, 0.0
      %s419 = sadd.s32 %s18, 1
    $region14: #{_forward_jit.3} parent=1 // loop_footer
      _
    $region15: #{_forward_jit.3} parent=1 // loop_footer_branch
      %17 = sbr.rel target = $region11
    $region16: #{_forward_jit.3} parent=1 // loop_exit
      _
    %420 = vst [vmem:[#allocation2] sm:$0xff] %v19
    // Predicated region
    $region17: #{_forward_jit.3} parent=1 // pred_check
      _
    $region18: #{_forward_jit.3} parent=1 // pred_check_branch
      %422 = sbr.rel (0) target = $region20
    $region19: #{_forward_jit.3} parent=1 // pred_region
      %s424 = ssub.s32 128, 128
      %425 = vsyncadd [#allocation3], %s424
      %s427 = sshll.u32 [#allocation2], 4
      %s428 = int_to_ptr.vmem [resolvable:$true] %s427
      %430 = dma.vmem_to_hbm [thread:$0]  %s428, 128, %s2, [#allocation3]
    $region20: #{_forward_jit.3} parent=1 // pred_fallthru
      _
    // Predicated region
    $region21: #{_forward_jit.3} parent=1 // pred_check
      _
    $region22: #{_forward_jit.3} parent=1 // pred_check_branch
      %432 = sbr.rel (0) target = $region24
    $region23: #{_forward_jit.3} parent=1 // pred_region
      %433 = dma.done [#allocation3], 128
    $region24: #{_forward_jit.3} parent=1 // pred_fallthru
      _
    %434 = vsyncpa [#allocation3], 1

// kernel: _forward_jit.2
$region0: #{_forward_jit.2}
  #allocation0 [shape = 'u32[]', space=smem, size = 0x4, offset = 0x4, fixed_abs, tag = 'smem constant byte address 0x4 - core index']
  #allocation1 [shape = 'u32[144,128]{1,0:T(1,128)}', space=vmem, size = 0x12000, scoped, tag = 'internal scratch']
  %s0 = inlined_call_operand.vmem [shape: f32[16,16], index: 0, kind: input, shape index: {}]
  %s1 = inlined_call_operand.vmem [shape: f32[16,128], index: 1, kind: input, shape index: {}]
  %s2 = inlined_call_operand.vmem [shape: f32[16,128], index: 2, kind: output, shape index: {}]
  %s3 = sld [smem:[#allocation0]]
  $region25: #{_forward_jit.2} parent=0
    _
  %s5 = ssub.s32 1, %s3
  %s6 = scalar_select 0, %s5, %s3
  // Predicated region
  $region2: #{_forward_jit.2} parent=0 // pred_check
    _
  $region3: #{_forward_jit.2} parent=0 // pred_check_branch
    %8 = sbr.rel (0) target = $region5
  $region4: #{_forward_jit.2} parent=0 // pred_region
    _
  $region5: #{_forward_jit.2} parent=0 // pred_fallthru
    _
  // Predicated region
  $region6: #{_forward_jit.2} parent=0 // pred_check
    _
  $region7: #{_forward_jit.2} parent=0 // pred_check_branch
    %10 = sbr.rel (0) target = $region9
  $region8: #{_forward_jit.2} parent=0 // pred_region
    _
  $region9: #{_forward_jit.2} parent=0 // pred_fallthru
    _
  %v12 = vld [vmem:[%s0] sm:$0xff]
  %v13 = vld [vmem:[%s0 + $0x8] sm:$0xff]
  %v14 = vpack.c.bf16 %v13, %v12
  %v15 = vld [vmem:[%s1] sm:$0xff]
  %v16 = vld [vmem:[%s1 + $0x8] sm:$0xff]
  %v17 = vmax.f32 %v15, 0.0
  %v18 = vmax.f32 %v16, 0.0
  // While loop
  $region10: #{_forward_jit.2} parent=0 // loop_pre_header
    _
  $region11: #{_forward_jit.2} parent=0 // loop_header
    %s20 = sphi 0, %s423
    %v21 = vphi %v17, %v391
    %v22 = vphi %v18, %v392
    %v23 = vphi inf, %v414
    %v24 = vphi 0.0, %v422
    %p25 = scmp.lt.s32.totalorder %s20, 125
    %s26 = vtos %v23
    %s27 = vtos %v24
    %s28 = smul.f32 %s27, 0.0001
    %s29 = sadd.f32 %s28, 1e-09
    %p30 = scmp.gt.f32.partialorder %s26, %s29
    %p31 = pnand %p25, %p30
    %p32 = pneg %p31
  $region12: #{_forward_jit.2} parent=0 // loop_header_branch
    %34 = sbr.rel (%p31) target = $region16
  $region13: #{_forward_jit.2} parent=0 // loop_body
    %v35 = vpack.c.bf16 %v22, %v21
    %v36 = vld [vmem:[%s1] sm:$0xff]
    %v37 = vld [vmem:[%s1 + $0x8] sm:$0xff]
    %vm38 = vcmask 130048
    %v40 = vsel %vm38, %v14, 0
    %42 = vmatprep.subr.bf16.mxu0 0
    %43 = vmatpush1.bf16.msra.mxu0 0
    %44 = vmatprep.subr.bf16.mxu0 0
    %45 = vmatpush1.bf16.msra.mxu0 0
    %46 = vmatprep.subr.bf16.mxu0 0
    %47 = vmatpush1.bf16.msra.mxu0 0
    %48 = vmatprep.subr.bf16.mxu0 0
    %49 = vmatpush1.bf16.msra.mxu0 0
    %50 = vmatprep.subr.bf16.mxu0 0
    %51 = vmatpush1.bf16.msra.mxu0 0
    %52 = vmatprep.subr.bf16.mxu0 0
    %53 = vmatpush1.bf16.msra.mxu0 0
    %54 = vmatprep.subr.bf16.mxu0 0
    %55 = vmatpush1.bf16.msra.mxu0 0
    %56 = vmatprep.subr.bf16.mxu0 0
    %57 = vmatpush1.bf16.msra.mxu0 %v35
    %58 = vmatprep.subr.bf16.mxu0 0
    %59 = vmatpush2.bf16.msra.mxu0 0
    %60 = vmatprep.subr.bf16.mxu0 0
    %61 = vmatpush2.bf16.msra.mxu0 0
    %62 = vmatprep.subr.bf16.mxu0 0
    %63 = vmatpush2.bf16.msra.mxu0 0
    %64 = vmatprep.subr.bf16.mxu0 0
    %65 = vmatpush2.bf16.msra.mxu0 0
    %66 = vmatprep.subr.bf16.mxu0 0
    %67 = vmatpush2.bf16.msra.mxu0 0
    %68 = vmatprep.subr.bf16.mxu0 0
    %69 = vmatpush2.bf16.msra.mxu0 0
    %70 = vmatprep.subr.bf16.mxu0 0
    %71 = vmatpush2.bf16.msra.mxu0 0
    %72 = vmatprep.subr.bf16.mxu0 0
    %73 = vmatpush2.bf16.msra.mxu0 0
    %74 = vmatprep.mubr.bf16.mxu0 0
    %75 = vmatmul.mubr.bf16.gmra.mxu0 %v40
    %v76 = vpop.f32.mrf.mxu0
    %v77 = vadd.f32 %v36, %v76
    %v78 = vpop.f32.mrf.mxu0
    %v79 = vpop.f32.mrf.mxu0
    %v80 = vadd.f32 %v37, %v79
    %v81 = vpop.f32.mrf.mxu0
    %82 = vdwg.mxu0
    %v83 = vmax.f32 %v77, 0.0
    %v84 = vmax.f32 %v80, 0.0
    %v85 = vpack.c.bf16 %v84, %v83
    %86 = vmatprep.subr.bf16.mxu0 0
    %87 = vmatpush1.bf16.msra.mxu0 0
    %88 = vmatprep.subr.bf16.mxu0 0
    %89 = vmatpush1.bf16.msra.mxu0 0
    %90 = vmatprep.subr.bf16.mxu0 0
    %91 = vmatpush1.bf16.msra.mxu0 0
    %92 = vmatprep.subr.bf16.mxu0 0
    %93 = vmatpush1.bf16.msra.mxu0 0
    %94 = vmatprep.subr.bf16.mxu0 0
    %95 = vmatpush1.bf16.msra.mxu0 0
    %96 = vmatprep.subr.bf16.mxu0 0
    %97 = vmatpush1.bf16.msra.mxu0 0
    %98 = vmatprep.subr.bf16.mxu0 0
    %99 = vmatpush1.bf16.msra.mxu0 0
    %100 = vmatprep.subr.bf16.mxu0 0
    %101 = vmatpush1.bf16.msra.mxu0 %v85
    %102 = vmatprep.subr.bf16.mxu0 0
    %103 = vmatpush2.bf16.msra.mxu0 0
    %104 = vmatprep.subr.bf16.mxu0 0
    %105 = vmatpush2.bf16.msra.mxu0 0
    %106 = vmatprep.subr.bf16.mxu0 0
    %107 = vmatpush2.bf16.msra.mxu0 0
    %108 = vmatprep.subr.bf16.mxu0 0
    %109 = vmatpush2.bf16.msra.mxu0 0
    %110 = vmatprep.subr.bf16.mxu0 0
    %111 = vmatpush2.bf16.msra.mxu0 0
    %112 = vmatprep.subr.bf16.mxu0 0
    %113 = vmatpush2.bf16.msra.mxu0 0
    %114 = vmatprep.subr.bf16.mxu0 0
    %115 = vmatpush2.bf16.msra.mxu0 0
    %116 = vmatprep.subr.bf16.mxu0 0
    %117 = vmatpush2.bf16.msra.mxu0 0
    %118 = vmatprep.mubr.bf16.mxu0 0
    %119 = vmatmul.mubr.bf16.gmra.mxu0 %v40
    %v120 = vpop.f32.mrf.mxu0
    %v121 = vadd.f32 %v36, %v120
    %v122 = vpop.f32.mrf.mxu0
    %v123 = vpop.f32.mrf.mxu0
    %v124 = vadd.f32 %v37, %v123
    %v125 = vpop.f32.mrf.mxu0
    %126 = vdwg.mxu0
    %v127 = vmax.f32 %v121, 0.0
    %v128 = vmax.f32 %v124, 0.0
    %v129 = vpack.c.bf16 %v128, %v127
    %130 = vmatprep.subr.bf16.mxu0 0
    %131 = vmatpush1.bf16.msra.mxu0 0
    %132 = vmatprep.subr.bf16.mxu0 0
    %133 = vmatpush1.bf16.msra.mxu0 0
    %134 = vmatprep.subr.bf16.mxu0 0
    %135 = vmatpush1.bf16.msra.mxu0 0
    %136 = vmatprep.subr.bf16.mxu0 0
    %137 = vmatpush1.bf16.msra.mxu0 0
    %138 = vmatprep.subr.bf16.mxu0 0
    %139 = vmatpush1.bf16.msra.mxu0 0
    %140 = vmatprep.subr.bf16.mxu0 0
    %141 = vmatpush1.bf16.msra.mxu0 0
    %142 = vmatprep.subr.bf16.mxu0 0
    %143 = vmatpush1.bf16.msra.mxu0 0
    %144 = vmatprep.subr.bf16.mxu0 0
    %145 = vmatpush1.bf16.msra.mxu0 %v129
    %146 = vmatprep.subr.bf16.mxu0 0
    %147 = vmatpush2.bf16.msra.mxu0 0
    %148 = vmatprep.subr.bf16.mxu0 0
    %149 = vmatpush2.bf16.msra.mxu0 0
    %150 = vmatprep.subr.bf16.mxu0 0
    %151 = vmatpush2.bf16.msra.mxu0 0
    %152 = vmatprep.subr.bf16.mxu0 0
    %153 = vmatpush2.bf16.msra.mxu0 0
    %154 = vmatprep.subr.bf16.mxu0 0
    %155 = vmatpush2.bf16.msra.mxu0 0
    %156 = vmatprep.subr.bf16.mxu0 0
    %157 = vmatpush2.bf16.msra.mxu0 0
    %158 = vmatprep.subr.bf16.mxu0 0
    %159 = vmatpush2.bf16.msra.mxu0 0
    %160 = vmatprep.subr.bf16.mxu0 0
    %161 = vmatpush2.bf16.msra.mxu0 0
    %162 = vmatprep.mubr.bf16.mxu0 0
    %163 = vmatmul.mubr.bf16.gmra.mxu0 %v40
    %v164 = vpop.f32.mrf.mxu0
    %v165 = vadd.f32 %v36, %v164
    %v166 = vpop.f32.mrf.mxu0
    %v167 = vpop.f32.mrf.mxu0
    %v168 = vadd.f32 %v37, %v167
    %v169 = vpop.f32.mrf.mxu0
    %170 = vdwg.mxu0
    %v171 = vmax.f32 %v165, 0.0
    %v172 = vmax.f32 %v168, 0.0
    %v173 = vpack.c.bf16 %v172, %v171
    %174 = vmatprep.subr.bf16.mxu0 0
    %175 = vmatpush1.bf16.msra.mxu0 0
    %176 = vmatprep.subr.bf16.mxu0 0
    %177 = vmatpush1.bf16.msra.mxu0 0
    %178 = vmatprep.subr.bf16.mxu0 0
    %179 = vmatpush1.bf16.msra.mxu0 0
    %180 = vmatprep.subr.bf16.mxu0 0
    %181 = vmatpush1.bf16.msra.mxu0 0
    %182 = vmatprep.subr.bf16.mxu0 0
    %183 = vmatpush1.bf16.msra.mxu0 0
    %184 = vmatprep.subr.bf16.mxu0 0
    %185 = vmatpush1.bf16.msra.mxu0 0
    %186 = vmatprep.subr.bf16.mxu0 0
    %187 = vmatpush1.bf16.msra.mxu0 0
    %188 = vmatprep.subr.bf16.mxu0 0
    %189 = vmatpush1.bf16.msra.mxu0 %v173
    %190 = vmatprep.subr.bf16.mxu0 0
    %191 = vmatpush2.bf16.msra.mxu0 0
    %192 = vmatprep.subr.bf16.mxu0 0
    %193 = vmatpush2.bf16.msra.mxu0 0
    %194 = vmatprep.subr.bf16.mxu0 0
    %195 = vmatpush2.bf16.msra.mxu0 0
    %196 = vmatprep.subr.bf16.mxu0 0
    %197 = vmatpush2.bf16.msra.mxu0 0
    %198 = vmatprep.subr.bf16.mxu0 0
    %199 = vmatpush2.bf16.msra.mxu0 0
    %200 = vmatprep.subr.bf16.mxu0 0
    %201 = vmatpush2.bf16.msra.mxu0 0
    %202 = vmatprep.subr.bf16.mxu0 0
    %203 = vmatpush2.bf16.msra.mxu0 0
    %204 = vmatprep.subr.bf16.mxu0 0
    %205 = vmatpush2.bf16.msra.mxu0 0
    %206 = vmatprep.mubr.bf16.mxu0 0
    %207 = vmatmul.mubr.bf16.gmra.mxu0 %v40
    %v208 = vpop.f32.mrf.mxu0
    %v209 = vadd.f32 %v36, %v208
    %v210 = vpop.f32.mrf.mxu0
    %v211 = vpop.f32.mrf.mxu0
    %v212 = vadd.f32 %v37, %v211
    %v213 = vpop.f32.mrf.mxu0
    %214 = vdwg.mxu0
    %v215 = vmax.f32 %v209, 0.0
    %v216 = vmax.f32 %v212, 0.0
    %v217 = vpack.c.bf16 %v216, %v215
    %218 = vmatprep.subr.bf16.mxu0 0
    %219 = vmatpush1.bf16.msra.mxu0 0
    %220 = vmatprep.subr.bf16.mxu0 0
    %221 = vmatpush1.bf16.msra.mxu0 0
    %222 = vmatprep.subr.bf16.mxu0 0
    %223 = vmatpush1.bf16.msra.mxu0 0
    %224 = vmatprep.subr.bf16.mxu0 0
    %225 = vmatpush1.bf16.msra.mxu0 0
    %226 = vmatprep.subr.bf16.mxu0 0
    %227 = vmatpush1.bf16.msra.mxu0 0
    %228 = vmatprep.subr.bf16.mxu0 0
    %229 = vmatpush1.bf16.msra.mxu0 0
    %230 = vmatprep.subr.bf16.mxu0 0
    %231 = vmatpush1.bf16.msra.mxu0 0
    %232 = vmatprep.subr.bf16.mxu0 0
    %233 = vmatpush1.bf16.msra.mxu0 %v217
    %234 = vmatprep.subr.bf16.mxu0 0
    %235 = vmatpush2.bf16.msra.mxu0 0
    %236 = vmatprep.subr.bf16.mxu0 0
    %237 = vmatpush2.bf16.msra.mxu0 0
    %238 = vmatprep.subr.bf16.mxu0 0
    %239 = vmatpush2.bf16.msra.mxu0 0
    %240 = vmatprep.subr.bf16.mxu0 0
    %241 = vmatpush2.bf16.msra.mxu0 0
    %242 = vmatprep.subr.bf16.mxu0 0
    %243 = vmatpush2.bf16.msra.mxu0 0
    %244 = vmatprep.subr.bf16.mxu0 0
    %245 = vmatpush2.bf16.msra.mxu0 0
    %246 = vmatprep.subr.bf16.mxu0 0
    %247 = vmatpush2.bf16.msra.mxu0 0
    %248 = vmatprep.subr.bf16.mxu0 0
    %249 = vmatpush2.bf16.msra.mxu0 0
    %250 = vmatprep.mubr.bf16.mxu0 0
    %251 = vmatmul.mubr.bf16.gmra.mxu0 %v40
    %v252 = vpop.f32.mrf.mxu0
    %v253 = vadd.f32 %v36, %v252
    %v254 = vpop.f32.mrf.mxu0
    %v255 = vpop.f32.mrf.mxu0
    %v256 = vadd.f32 %v37, %v255
    %v257 = vpop.f32.mrf.mxu0
    %258 = vdwg.mxu0
    %v259 = vmax.f32 %v253, 0.0
    %v260 = vmax.f32 %v256, 0.0
    %v261 = vpack.c.bf16 %v260, %v259
    %262 = vmatprep.subr.bf16.mxu0 0
    %263 = vmatpush1.bf16.msra.mxu0 0
    %264 = vmatprep.subr.bf16.mxu0 0
    %265 = vmatpush1.bf16.msra.mxu0 0
    %266 = vmatprep.subr.bf16.mxu0 0
    %267 = vmatpush1.bf16.msra.mxu0 0
    %268 = vmatprep.subr.bf16.mxu0 0
    %269 = vmatpush1.bf16.msra.mxu0 0
    %270 = vmatprep.subr.bf16.mxu0 0
    %271 = vmatpush1.bf16.msra.mxu0 0
    %272 = vmatprep.subr.bf16.mxu0 0
    %273 = vmatpush1.bf16.msra.mxu0 0
    %274 = vmatprep.subr.bf16.mxu0 0
    %275 = vmatpush1.bf16.msra.mxu0 0
    %276 = vmatprep.subr.bf16.mxu0 0
    %277 = vmatpush1.bf16.msra.mxu0 %v261
    %278 = vmatprep.subr.bf16.mxu0 0
    %279 = vmatpush2.bf16.msra.mxu0 0
    %280 = vmatprep.subr.bf16.mxu0 0
    %281 = vmatpush2.bf16.msra.mxu0 0
    %282 = vmatprep.subr.bf16.mxu0 0
    %283 = vmatpush2.bf16.msra.mxu0 0
    %284 = vmatprep.subr.bf16.mxu0 0
    %285 = vmatpush2.bf16.msra.mxu0 0
    %286 = vmatprep.subr.bf16.mxu0 0
    %287 = vmatpush2.bf16.msra.mxu0 0
    %288 = vmatprep.subr.bf16.mxu0 0
    %289 = vmatpush2.bf16.msra.mxu0 0
    %290 = vmatprep.subr.bf16.mxu0 0
    %291 = vmatpush2.bf16.msra.mxu0 0
    %292 = vmatprep.subr.bf16.mxu0 0
    %293 = vmatpush2.bf16.msra.mxu0 0
    %294 = vmatprep.mubr.bf16.mxu0 0
    %295 = vmatmul.mubr.bf16.gmra.mxu0 %v40
    %v296 = vpop.f32.mrf.mxu0
    %v297 = vadd.f32 %v36, %v296
    %v298 = vpop.f32.mrf.mxu0
    %v299 = vpop.f32.mrf.mxu0
    %v300 = vadd.f32 %v37, %v299
    %v301 = vpop.f32.mrf.mxu0
    %302 = vdwg.mxu0
    %v303 = vmax.f32 %v297, 0.0
    %v304 = vmax.f32 %v300, 0.0
    %v305 = vpack.c.bf16 %v304, %v303
    %306 = vmatprep.subr.bf16.mxu0 0
    %307 = vmatpush1.bf16.msra.mxu0 0
    %308 = vmatprep.subr.bf16.mxu0 0
    %309 = vmatpush1.bf16.msra.mxu0 0
    %310 = vmatprep.subr.bf16.mxu0 0
    %311 = vmatpush1.bf16.msra.mxu0 0
    %312 = vmatprep.subr.bf16.mxu0 0
    %313 = vmatpush1.bf16.msra.mxu0 0
    %314 = vmatprep.subr.bf16.mxu0 0
    %315 = vmatpush1.bf16.msra.mxu0 0
    %316 = vmatprep.subr.bf16.mxu0 0
    %317 = vmatpush1.bf16.msra.mxu0 0
    %318 = vmatprep.subr.bf16.mxu0 0
    %319 = vmatpush1.bf16.msra.mxu0 0
    %320 = vmatprep.subr.bf16.mxu0 0
    %321 = vmatpush1.bf16.msra.mxu0 %v305
    %322 = vmatprep.subr.bf16.mxu0 0
    %323 = vmatpush2.bf16.msra.mxu0 0
    %324 = vmatprep.subr.bf16.mxu0 0
    %325 = vmatpush2.bf16.msra.mxu0 0
    %326 = vmatprep.subr.bf16.mxu0 0
    %327 = vmatpush2.bf16.msra.mxu0 0
    %328 = vmatprep.subr.bf16.mxu0 0
    %329 = vmatpush2.bf16.msra.mxu0 0
    %330 = vmatprep.subr.bf16.mxu0 0
    %331 = vmatpush2.bf16.msra.mxu0 0
    %332 = vmatprep.subr.bf16.mxu0 0
    %333 = vmatpush2.bf16.msra.mxu0 0
    %334 = vmatprep.subr.bf16.mxu0 0
    %335 = vmatpush2.bf16.msra.mxu0 0
    %336 = vmatprep.subr.bf16.mxu0 0
    %337 = vmatpush2.bf16.msra.mxu0 0
    %338 = vmatprep.mubr.bf16.mxu0 0
    %339 = vmatmul.mubr.bf16.gmra.mxu0 %v40
    %v340 = vpop.f32.mrf.mxu0
    %v341 = vadd.f32 %v36, %v340
    %v342 = vpop.f32.mrf.mxu0
    %v343 = vpop.f32.mrf.mxu0
    %v344 = vadd.f32 %v37, %v343
    %v345 = vpop.f32.mrf.mxu0
    %346 = vdwg.mxu0
    %v347 = vmax.f32 %v341, 0.0
    %v348 = vmax.f32 %v344, 0.0
    %v349 = vpack.c.bf16 %v348, %v347
    %350 = vmatprep.subr.bf16.mxu0 0
    %351 = vmatpush1.bf16.msra.mxu0 0
    %352 = vmatprep.subr.bf16.mxu0 0
    %353 = vmatpush1.bf16.msra.mxu0 0
    %354 = vmatprep.subr.bf16.mxu0 0
    %355 = vmatpush1.bf16.msra.mxu0 0
    %356 = vmatprep.subr.bf16.mxu0 0
    %357 = vmatpush1.bf16.msra.mxu0 0
    %358 = vmatprep.subr.bf16.mxu0 0
    %359 = vmatpush1.bf16.msra.mxu0 0
    %360 = vmatprep.subr.bf16.mxu0 0
    %361 = vmatpush1.bf16.msra.mxu0 0
    %362 = vmatprep.subr.bf16.mxu0 0
    %363 = vmatpush1.bf16.msra.mxu0 0
    %364 = vmatprep.subr.bf16.mxu0 0
    %365 = vmatpush1.bf16.msra.mxu0 %v349
    %366 = vmatprep.subr.bf16.mxu0 0
    %367 = vmatpush2.bf16.msra.mxu0 0
    %368 = vmatprep.subr.bf16.mxu0 0
    %369 = vmatpush2.bf16.msra.mxu0 0
    %370 = vmatprep.subr.bf16.mxu0 0
    %371 = vmatpush2.bf16.msra.mxu0 0
    %372 = vmatprep.subr.bf16.mxu0 0
    %373 = vmatpush2.bf16.msra.mxu0 0
    %374 = vmatprep.subr.bf16.mxu0 0
    %375 = vmatpush2.bf16.msra.mxu0 0
    %376 = vmatprep.subr.bf16.mxu0 0
    %377 = vmatpush2.bf16.msra.mxu0 0
    %378 = vmatprep.subr.bf16.mxu0 0
    %379 = vmatpush2.bf16.msra.mxu0 0
    %380 = vmatprep.subr.bf16.mxu0 0
    %381 = vmatpush2.bf16.msra.mxu0 0
    %382 = vmatprep.mubr.bf16.mxu0 0
    %383 = vmatmul.mubr.bf16.gmra.mxu0 %v40
    %v384 = vpop.f32.mrf.mxu0
    %v385 = vadd.f32 %v36, %v384
    %v386 = vpop.f32.mrf.mxu0
    %v387 = vpop.f32.mrf.mxu0
    %v388 = vadd.f32 %v37, %v387
    %v389 = vpop.f32.mrf.mxu0
    %390 = vdwg.mxu0
    %v391 = vmax.f32 %v385, 0.0
    %v392 = vmax.f32 %v388, 0.0
    %v393 = vsub.f32 %v391, %v21
    %v394 = vsub.f32 %v392, %v22
    %v395 = vand.u32 2147483647, %v393
    %v396 = vand.u32 2147483647, %v394
    %397 = vmax.xlane.f32.xlu0 %v395
    %v398 = vpop.xlane.xlu0 %397
    %399 = vmax.xlane.f32.xlu0 %v396
    %v400 = vpop.xlane.xlu0 %399
    %v401 = vand.u32 2147483647, %v391
    %v402 = vand.u32 2147483647, %v392
    %403 = vmax.xlane.f32.xlu0 %v401
    %v404 = vpop.xlane.xlu0 %403
    %405 = vmax.xlane.f32.xlu0 %v402
    %v406 = vpop.xlane.xlu0 %405
    %v407 = vmax.f32 %v398, %v400
    %v408 = vrot.slane %v407, 4
    %v409 = vmax.f32 %v407, %v408
    %v410 = vrot.slane %v409, 2
    %v411 = vmax.f32 %v409, %v410
    %v412 = vrot.slane %v411, 1
    %v413 = vmax.f32 %v411, %v412
    %v414 = vmax.f32 %v413, 0.0
    %v415 = vmax.f32 %v404, %v406
    %v416 = vrot.slane %v415, 4
    %v417 = vmax.f32 %v415, %v416
    %v418 = vrot.slane %v417, 2
    %v419 = vmax.f32 %v417, %v418
    %v420 = vrot.slane %v419, 1
    %v421 = vmax.f32 %v419, %v420
    %v422 = vmax.f32 %v421, 0.0
    %s423 = sadd.s32 %s20, 1
  $region14: #{_forward_jit.2} parent=0 // loop_footer
    _
  $region15: #{_forward_jit.2} parent=0 // loop_footer_branch
    %19 = sbr.rel target = $region11
  $region16: #{_forward_jit.2} parent=0 // loop_exit
    _
  %424 = vst [vmem:[%s2] sm:$0xff] %v21
  %425 = vst [vmem:[%s2 + $0x8] sm:$0xff] %v22
  // Predicated region
  $region17: #{_forward_jit.2} parent=0 // pred_check
    _
  $region18: #{_forward_jit.2} parent=0 // pred_check_branch
    %427 = sbr.rel (0) target = $region20
  $region19: #{_forward_jit.2} parent=0 // pred_region
    _
  $region20: #{_forward_jit.2} parent=0 // pred_fallthru
    _
  // Predicated region
  $region21: #{_forward_jit.2} parent=0 // pred_check
    _
  $region22: #{_forward_jit.2} parent=0 // pred_check_branch
    %429 = sbr.rel (0) target = $region24
  $region23: #{_forward_jit.2} parent=0 // pred_region
    _
  $region24: #{_forward_jit.2} parent=0 // pred_fallthru
    _

</llo_original>
